<compile_context>
chip_gen: v7x
topology: tpu7x:2x2x1
jax: 0.10.0
libtpu: 0.0.40
codegen_flags: <defaults>
</compile_context>

<pallas_src>
import jax
import jax.numpy as jnp
from jax import lax
from jax.experimental import pallas as pl
from jax.experimental.pallas import tpu as pltpu


def _selected_dims(rank, axis, nidx):
    """(tensor_dim, index_slot) pairs, matching SelectModule.forward exactly."""
    if rank == 2:
        if axis == 0:
            return [(0, 0)]
        elif axis == 1:
            return [(1, 0)]
        else:
            return [(0, 0), (1, 1)]
    else:  # rank == 3
        if axis == 0:
            if nidx == 1:
                return [(0, 0)]
            return [(0, 0), (1, 1)]
        elif axis == 1:
            if nidx == 1:
                return [(2, 0)]          # a[:, :, i0]
            return [(1, 0), (2, 1)]      # a[:, i0, i1]
        else:
            if nidx == 2:
                return [(0, 0), (2, 1)]          # a[i0, :, i1]
            return [(0, 0), (1, 1), (2, 2)]      # a[i0, i1, i2]


def _make_kernel(rank, sub_sel, lane_sel):
    """Kernel: (optional) dynamic sublane select -> (optional) lane mask-reduce
    -> double.  Leading-dim selection already happened at DMA time."""

    def kernel(idx_ref, x_ref, o_ref):
        if sub_sel is not None:
            d, slot = sub_sel
            idx = [slice(None)] * rank
            idx[d] = pl.ds(idx_ref[slot], 1)      # dynamic sublane load
            x = x_ref[tuple(idx)]
        else:
            x = x_ref[...]

        if lane_sel is not None:
            d, slot = lane_sel
            j = idx_ref[slot]
            ids = lax.broadcasted_iota(jnp.int32, x.shape, dimension=d)
            # Exact for floats: every unselected term contributes exactly 0.
            x = jnp.sum(jnp.where(ids == j, x, 0.0), axis=d, keepdims=True)

        # Apply the (a + a) doubling only to the selected slice.
        o_ref[...] = (x + x).astype(o_ref.dtype)

    return kernel


def select_module_forward(a, indices, axis):
    """Pallas implementation of SelectModule(indices, axis, rank=a.ndim)(a)."""
    rank = a.ndim
    nidx = len(indices)
    sel = _selected_dims(rank, axis, nidx)
    sel_dims = {d for d, _ in sel}

    # Normalize (negative) and clamp indices wrapper-side so the prefetch-driven
    # DMA index can never be out of bounds.
    idx_vals = [0, 0, 0]
    for dim, slot in sel:
        i = int(indices[slot])
        if i < 0:
            i += a.shape[dim]
        i = max(0, min(i, a.shape[dim] - 1))
        idx_vals[slot] = i
    idx_arr = jnp.asarray(idx_vals, dtype=jnp.int32)

    # Classify selected dims:
    #   dims < rank-2      -> selected at DMA time via index_map (block size 1)
    #   dim == rank-2      -> dynamic sublane ref load in-kernel
    #   dim == rank-1      -> lane-dim iota-mask + reduce in-kernel
    dma_sel = {d: s for d, s in sel if d < rank - 2}
    sub_sel = next(((d, s) for d, s in sel if d == rank - 2), None)
    lane_sel = next(((d, s) for d, s in sel if d == rank - 1), None)

    # Input block: size-1 on DMA-selected dims, full extent elsewhere (last two
    # dims stay full -> satisfies the (8,128)-or-full constraint).
    in_block = tuple(1 if d in dma_sel else a.shape[d] for d in range(rank))

    def in_index_map(_g, idx_ref, _dma=dma_sel, _rank=rank):
        # Block size is 1 along DMA-selected dims, so block index == element
        # index: only the selected slice is DMA'd HBM->VMEM.
        return tuple(idx_ref[_dma[d]] if d in _dma else 0 for d in range(_rank))

    # Kernel output keeps size-1 dims for every selected dim; wrapper squeezes.
    keep_shape = tuple(1 if d in sel_dims else s for d, s in enumerate(a.shape))
    final_shape = tuple(s for d, s in enumerate(a.shape) if d not in sel_dims)
    out_zero = (0,) * rank

    kernel = _make_kernel(rank, sub_sel, lane_sel)

    out = pl.pallas_call(
        kernel,
        out_shape=jax.ShapeDtypeStruct(keep_shape, a.dtype),
        grid_spec=pltpu.PrefetchScalarGridSpec(
            num_scalar_prefetch=1,
            grid=(1,),
            in_specs=[pl.BlockSpec(in_block, in_index_map)],
            out_specs=pl.BlockSpec(keep_shape, lambda _g, _idx: out_zero),
        ),
        compiler_params=pltpu.CompilerParams(
            dimension_semantics=("arbitrary",)),
    )(idx_arr, a)
    return out.reshape(final_shape)


def _reference(a, indices, axis):
    """Pure-JAX mirror of the PyTorch forward (for correctness checking)."""
    x = a + a
    rank = a.ndim
    if rank == 2:
        if axis == 0:
            return x[indices[0], :]
        elif axis == 1:
            return x[:, indices[0]]
        else:
            return x[indices[0], indices[1]]
    else:
        if axis == 0:
            if len(indices) == 1:
                return x[indices[0], :, :]
            return x[indices[0], indices[1], :]
        elif axis == 1:
            if len(indices) == 1:
                return x[:, :, indices[0]]
            return x[:, indices[0], indices[1]]
        elif len(indices) == 2:
            return x[indices[0], :, indices[1]]
        else:
            return x[indices[0], indices[1], indices[2]]


if __name__ == "__main__":
    key = jax.random.PRNGKey(0)
    k2, k3 = jax.random.split(key)
    a2 = jax.random.normal(k2, (8, 16), dtype=jnp.float32)     # rank-2 input
    a3 = jax.random.normal(k3, (4, 8, 16), dtype=jnp.float32)  # rank-3 input

    # (input, indices, axis) — covering every branch of SelectModule.forward
    cases = [
        (a2, (3,), 0),
        (a2, (5,), 1),
        (a2, (2, 7), 2),
        (a3, (1,), 0),
        (a3, (2, 3), 0),
        (a3, (4,), 1),
        (a3, (3, 9), 1),
        (a3, (2, 11), 2),
        (a3, (1, 5, 13), 2),
    ]

    for a, indices, axis in cases:
        out = select_module_forward(a, indices, axis)
        jax.block_until_ready(out)
        ref = _reference(a, indices, axis)
        assert out.shape == ref.shape, (out.shape, ref.shape)
        assert jnp.allclose(out, ref, atol=1e-6, rtol=1e-6), (indices, axis)

    print("KERNEL_OK")
</pallas_src>

<mosaic_0001>
module attributes {stable_mosaic.version = 11 : i64} {
  func.func @kernel(%arg0: i32, %arg1: memref<3xi32, #tpu.memory_space<smem>>, %arg2: memref<8x16xf32, #tpu.memory_space<vmem>>, %arg3: memref<1x16xf32, #tpu.memory_space<vmem>>) attributes {dimension_semantics = [#tpu.dimension_semantics<arbitrary>], iteration_bounds = array<i64: 1>, scalar_prefetch = 1 : i64, scratch_operands = 0 : i64, tpu.core_type = #tpu.core_type<tc>, window_params = [{pipeline_mode = #tpu.pipeline_mode<synchronous>, transform_indices = @transform_0, window_bounds = array<i64: 8, 16>}, {pipeline_mode = #tpu.pipeline_mode<synchronous>, transform_indices = @transform_1, window_bounds = array<i64: 1, 16>}]} {
    %c0 = arith.constant 0 : index
    %0 = memref.load %arg1[%c0] : memref<3xi32, #tpu.memory_space<smem>>
    %1 = arith.index_cast %0 : i32 to index
    %c0_0 = arith.constant 0 : index
    %2 = vector.load %arg2[%1, %c0_0] : memref<8x16xf32, #tpu.memory_space<vmem>>, vector<1x16xf32>
    %3 = arith.addf %2, %2 : vector<1x16xf32>
    %c0_1 = arith.constant 0 : index
    %c0_2 = arith.constant 0 : index
    %4 = vector.load %arg3[%c0_1, %c0_2] : memref<1x16xf32, #tpu.memory_space<vmem>>, vector<1x16xf32>
    tpu.vector_store %arg3[%c0_1, %c0_2], %3 {strides = array<i32>} : memref<1x16xf32, #tpu.memory_space<vmem>>, vector<1x16xf32>,
    return
  }
  func.func @transform_0(%arg0: i32, %arg1: memref<3xi32, #tpu.memory_space<smem>>) -> (i32, i32) {
    %c0_i32 = arith.constant 0 : i32
    %c0_i32_0 = arith.constant 0 : i32
    %c0_i32_1 = arith.constant 0 : i32
    return %c0_i32, %c0_i32_0 : i32, i32
  }
  func.func @transform_1(%arg0: i32, %arg1: memref<3xi32, #tpu.memory_space<smem>>) -> (i32, i32) {
    %c0_i32 = arith.constant 0 : i32
    %c0_i32_0 = arith.constant 0 : i32
    %c0_i32_1 = arith.constant 0 : i32
    return %c0_i32, %c0_i32_0 : i32, i32
  }
}

</mosaic_0001>

<llo_original>
// kernel: tpu_custom_call.1
$region0: #{tpu_custom_call.1}
  #allocation0 [shape = 'u32[]', space=smem, size = 0x4, offset = 0x4, fixed_abs, tag = 'smem constant byte address 0x4 - core index']
  #allocation1 [shape = 'u32[144,128]{1,0:T(1,128)}', space=vmem, size = 0x12000, scoped, tag = 'internal scratch']
  #allocation2 [shape = 's32[1]{0}', space=sflag, size = 0x4, scoped, tag = 'scoped memory for tpu_custom_call.1']
  #allocation3 [shape = 'u8[512]{0}', space=smem, size = 0x200, scoped, tag = 'prefetched SMEM operand 0']
  %s0 = inlined_call_operand.hbm [shape: s32[3], index: 0, kind: input, shape index: {}]
  %s1 = inlined_call_operand.hbm [shape: f32[8,16], index: 1, kind: input, shape index: {}]
  %s2 = inlined_call_operand.hbm [shape: f32[1,16], index: 2, kind: output, shape index: {}]
  %s3 = sld [smem:[#allocation0]]
  $region18: #{tpu_custom_call.1} parent=0
    _
  %s5 = ssub.s32 1, %s3
  %s6 = scalar_select 0, %s5, %s3
  %8 = dma.hbm_to_smem %s0, 16, [#allocation3], [#allocation2]
  %9 = dma.done [#allocation2], 16
  %10 = sfence
  $region1: #{tpu_custom_call.1} parent=0
    #allocation4 [shape = 'u8[4096]{0}', space=vmem, size = 0x1000, scoped, tag = 'input window, operand 1, single buffered']
    #allocation5 [shape = 's32[1]{0}', space=sflag, size = 0x4, scoped, tag = 'scoped memory for tpu_custom_call.1']
    #allocation6 [shape = 's32[1]{0}', space=sflag, size = 0x4, scoped, tag = 'scoped memory for tpu_custom_call.1']
    #allocation7 [shape = 'u8[512]{0}', space=vmem, size = 0x400, scoped, tag = 'output window, operand 0, single buffered']
    %11 = vsyncpa [#allocation5], 0
    %12 = vsyncpa [#allocation6], 0
    // Predicated region
    $region2: #{tpu_custom_call.1} parent=1 // pred_check
      _
    $region3: #{tpu_custom_call.1} parent=1 // pred_check_branch
      %14 = sbr.rel (0) target = $region5
    $region4: #{tpu_custom_call.1} parent=1 // pred_region
      %s16 = ssub.s32 128, 128
      %17 = vsyncadd [#allocation5], %s16
      %s19 = sshll.u32 [#allocation4], 4
      %s20 = int_to_ptr.vmem [resolvable:$true] %s19
      %22 = dma.hbm_to_vmem [thread:$0]  %s1, 128, %s20, [#allocation5]
    $region5: #{tpu_custom_call.1} parent=1 // pred_fallthru
      _
    // Predicated region
    $region6: #{tpu_custom_call.1} parent=1 // pred_check
      _
    $region7: #{tpu_custom_call.1} parent=1 // pred_check_branch
      %24 = sbr.rel (0) target = $region9
    $region8: #{tpu_custom_call.1} parent=1 // pred_region
      %25 = dma.done [#allocation5], 128
    $region9: #{tpu_custom_call.1} parent=1 // pred_fallthru
      _
    %s26 = sld [smem:[#allocation3]]
    %s27 = scalar_lea.vmem [#allocation4], %s26
    %v28 = vld [vmem:[%s27] sm:$0x1]
    %v29 = vadd.f32 %v28, %v28
    %vm30 = vcmask 122880
    %31 = vst.msk [vmem:[#allocation7] sm:$0x1] %vm30, %v29
    // Predicated region
    $region10: #{tpu_custom_call.1} parent=1 // pred_check
      _
    $region11: #{tpu_custom_call.1} parent=1 // pred_check_branch
      %33 = sbr.rel (0) target = $region13
    $region12: #{tpu_custom_call.1} parent=1 // pred_region
      %s35 = ssub.s32 16, 16
      %36 = vsyncadd [#allocation6], %s35
      %s38 = sshll.u32 [#allocation7], 4
      %s39 = int_to_ptr.vmem [resolvable:$true] %s38
      %41 = dma.vmem_to_hbm [thread:$0]  %s39, 16, %s2, [#allocation6]
    $region13: #{tpu_custom_call.1} parent=1 // pred_fallthru
      _
    // Predicated region
    $region14: #{tpu_custom_call.1} parent=1 // pred_check
      _
    $region15: #{tpu_custom_call.1} parent=1 // pred_check_branch
      %43 = sbr.rel (0) target = $region17
    $region16: #{tpu_custom_call.1} parent=1 // pred_region
      %44 = dma.done [#allocation6], 16
    $region17: #{tpu_custom_call.1} parent=1 // pred_fallthru
      _
    %45 = vsyncpa [#allocation5], 1
    %46 = vsyncpa [#allocation6], 1

</llo_original>
